<compile_context>
chip_gen: v7x
topology: tpu7x:2x2x1
jax: 0.10.0
libtpu: 0.0.40
codegen_flags: <defaults>
</compile_context>

<pallas_src>
import jax
import jax.numpy as jnp
from jax.experimental import pallas as pl
from jax.experimental.pallas import tpu as pltpu


_TARGET_BLOCK_BYTES = 2 * 1024 * 1024   # ~2 MiB per streamed x block (1-4 MiB sweet spot)
_F32_TEMPS_PER_TILE = 3                 # live f32 (C, T) temporaries in the tiled kernel
_FUSED_F32_TEMPS = 4                    # live f32 (C, HW) temporaries in the fused kernel
_VMEM_USE_FRACTION = 0.7                # headroom below the scoped VMEM limit


def _vmem_caps():
    """(physical_vmem_bytes, scoped_vmem_limit_bytes) for the local TPU gen."""
    try:
        phys = int(pltpu.get_tpu_info().vmem_capacity_bytes)
    except Exception:
        phys = 64 * 1024 * 1024          # conservative fallback (v7x per-TC)
    limit = min((phys * 3) // 4, phys - 8 * 1024 * 1024)   # ~96 MiB v5e/v6e, ~48 MiB v7x
    limit = max(limit, 32 * 1024 * 1024)
    return phys, limit


def _fused_fits(c, hw, itemsize, vmem_limit):
    """Can a whole (C, HW) slab (double-buffered x/y/out + f32 temps) fit VMEM?"""
    stream = 6 * c * hw * itemsize                 # x, y, out blocks, double-buffered
    temps = _FUSED_F32_TEMPS * c * hw * 4          # in-kernel f32 temporaries
    return (stream + temps) <= int(_VMEM_USE_FRACTION * vmem_limit)


def _pick_hw_tile(hw, c, itemsize, vmem_limit):
    """Largest lane-dense HW tile (multiple of 128) that (a) targets ~2 MiB per
    streamed block and (b) keeps double-buffered blocks plus in-kernel f32
    temporaries inside the scoped VMEM budget.  Used with a cdiv grid so it
    need not divide HW (Pallas masks the partial last block)."""
    per_lane = c * (6 * itemsize + _F32_TEMPS_PER_TILE * 4)
    fit_lanes = int(_VMEM_USE_FRACTION * vmem_limit) // max(per_lane, 1)
    target_lanes = _TARGET_BLOCK_BYTES // max(c * itemsize, 1)
    t = min(fit_lanes, target_lanes, hw)
    if t >= hw:
        return hw
    return max(128, (t // 128) * 128)


def _spatial_gate(y, w_max, w_mean):
    """sigmoid(w_max * max_c(y) + w_mean * mean_c(y)), per spatial location."""
    ymax = jnp.max(y, axis=0, keepdims=True).astype(jnp.float32)     # (1, T)
    ymean = jnp.mean(y, axis=0, keepdims=True).astype(jnp.float32)   # (1, T)
    return jax.nn.sigmoid(w_max * ymax + w_mean * ymean)             # (1, T) f32


def fefu_fused_kernel(x_ref, y_ref, wchnt_ref, wspa_ref, wpox_ref, wpoy_ref,
                      bias_ref, o_ref):
    # x_ref / y_ref / o_ref: (C, HW) -- channels on sublanes, HW on lanes.
    # wchnt_ref: (C, C) = w_chn.T in f32.  wspa_ref: (2,) scalars in SMEM.
    # wpox_ref / wpoy_ref: (C, C) project_out halves (activation dtype).
    # bias_ref: (C, 1) f32.
    x = x_ref[...]
    y = y_ref[...]

    # Channel attention computed in-kernel -> no second HBM pass over x.
    # The mean over HW accumulates in f32 (upcast is a no-op for f32 inputs;
    # for bf16 inputs this tiny path is gated by the VMEM fit check).
    avg = jnp.mean(x.astype(jnp.float32), axis=1, keepdims=True)       # (C, 1)
    chn_row = jax.nn.sigmoid(
        jnp.sum(wchnt_ref[...] * avg, axis=0, keepdims=True))          # (1, C)
    # Fold the per-channel gate into the x-half weight columns:
    #   (wpox * chn) @ x == wpox @ (chn * x)   -- removes a (C, HW) VPU multiply.
    wpox_eff = (wpox_ref[...].astype(jnp.float32) * chn_row).astype(x.dtype)

    spa = _spatial_gate(y, wspa_ref[0], wspa_ref[1])                   # (1, HW)
    ys = y * spa.astype(y.dtype)

    # project_out: two C-deep dots with f32 accumulation on the MXU.  Fusing
    # into one 2C-deep dot only pays for C < 128 and would need an extra
    # (2C, HW) VMEM concat copy; while HBM-bound that is noise, so keep the
    # copy-free two-dot form.
    out = (jnp.dot(wpox_eff, x, preferred_element_type=jnp.float32)
           + jnp.dot(wpoy_ref[...], ys, preferred_element_type=jnp.float32)
           + bias_ref[...])
    o_ref[...] = out.astype(o_ref.dtype)


def fefu_tiled_kernel(x_ref, y_ref, wspa_ref, wpoxb_ref, wpoy_ref, bias_ref,
                      o_ref):
    # x_ref / y_ref / o_ref: (C, T_HW).  wpoxb_ref: (C, C) with this batch
    # element's channel attention pre-folded into its columns.
    x = x_ref[...]
    y = y_ref[...]
    spa = _spatial_gate(y, wspa_ref[0], wspa_ref[1])                   # (1, T)
    ys = y * spa.astype(y.dtype)
    out = (jnp.dot(wpoxb_ref[...], x, preferred_element_type=jnp.float32)
           + jnp.dot(wpoy_ref[...], ys, preferred_element_type=jnp.float32)
           + bias_ref[...])
    o_ref[...] = out.astype(o_ref.dtype)


def fefu_forward(x_nchw, y_nchw, params, *, force_tiled=False, hw_tile=None):
    """FEFU forward.  x, y: (B, C, H, W) in PyTorch NCHW convention."""
    B, C, H, W = x_nchw.shape
    HW = H * W
    x = x_nchw.reshape(B, C, HW)        # free reshape, no transpose
    y = y_nchw.reshape(B, C, HW)
    act_dtype = x.dtype
    itemsize = jnp.dtype(act_dtype).itemsize

    w_chn = params["w_chn"].astype(jnp.float32)                # (C, C)
    w_spa = params["w_spa"].reshape(2).astype(jnp.float32)     # (2,)
    w_po = params["w_po"]                                      # (C, 2C)
    bias = params["b_po"].reshape(C, 1).astype(jnp.float32)    # (C, 1)

    # Weights cast (tiny) to the activation dtype so bf16 activations feed the
    # MXU directly; f32 accumulation keeps accuracy.
    wpo_x = w_po[:, :C].astype(act_dtype)
    wpo_y = w_po[:, C:].astype(act_dtype)

    _, vmem_limit = _vmem_caps()

    def compiler(sem):
        return pltpu.CompilerParams(dimension_semantics=sem,
                                    vmem_limit_bytes=vmem_limit)

    use_fused = (not force_tiled and hw_tile is None
                 and _fused_fits(C, HW, itemsize, vmem_limit))

    if use_fused:
        # NOTE: constant-index weight blocks are still double-buffered by
        # Pallas; for very large C one could add pipeline_mode=pl.Buffered(1),
        # left at the default here for portability.
        out = pl.pallas_call(
            fefu_fused_kernel,
            out_shape=jax.ShapeDtypeStruct((B, C, HW), act_dtype),
            grid_spec=pltpu.PrefetchScalarGridSpec(
                num_scalar_prefetch=0,
                grid=(B,),
                in_specs=[
                    pl.BlockSpec((None, C, HW), lambda b: (b, 0, 0)),    # x
                    pl.BlockSpec((None, C, HW), lambda b: (b, 0, 0)),    # y
                    pl.BlockSpec((C, C), lambda b: (0, 0)),              # w_chn.T
                    pl.BlockSpec(memory_space=pltpu.MemorySpace.SMEM),   # w_spa
                    pl.BlockSpec((C, C), lambda b: (0, 0)),              # wpo_x
                    pl.BlockSpec((C, C), lambda b: (0, 0)),              # wpo_y
                    pl.BlockSpec((C, 1), lambda b: (0, 0)),              # bias
                ],
                out_specs=pl.BlockSpec((None, C, HW), lambda b: (b, 0, 0)),
            ),
            compiler_params=compiler(("parallel",)),
        )(x, y, w_chn.T, w_spa, wpo_x, wpo_y, bias)
        return out.reshape(B, C, H, W)

    # --- tiled path: channel attention hoisted to a tiny pure-JAX pre-pass ---
    # (one extra HBM read of x; unavoidable once a batch slab exceeds VMEM.
    #  XLA fuses the f32 convert into the reduction, so x is read once here.)
    avg = jnp.mean(x.astype(jnp.float32), axis=2)                      # (B, C)
    chn = jax.nn.sigmoid(avg @ w_chn.T)                                # (B, C)
    # Fold the gate into the x-half weight columns (per-batch, tiny (B, C, C)).
    wpox_b = (wpo_x.astype(jnp.float32)[None, :, :]
              * chn[:, None, :]).astype(act_dtype)                     # (B, C, C)

    if hw_tile is not None:
        t_hw = min(int(hw_tile), HW)
        if t_hw < HW and t_hw % 128 != 0:
            t_hw = max(128, (t_hw // 128) * 128)
    else:
        t_hw = _pick_hw_tile(HW, C, itemsize, vmem_limit)
    n_hw = pl.cdiv(HW, t_hw)          # partial last block is masked by Pallas

    out = pl.pallas_call(
        fefu_tiled_kernel,
        out_shape=jax.ShapeDtypeStruct((B, C, HW), act_dtype),
        grid_spec=pltpu.PrefetchScalarGridSpec(
            num_scalar_prefetch=0,
            grid=(B, n_hw),
            in_specs=[
                pl.BlockSpec((None, C, t_hw), lambda b, t: (b, 0, t)),   # x
                pl.BlockSpec((None, C, t_hw), lambda b, t: (b, 0, t)),   # y
                pl.BlockSpec(memory_space=pltpu.MemorySpace.SMEM),       # w_spa
                pl.BlockSpec((None, C, C), lambda b, t: (b, 0, 0)),      # wpo_x*chn
                pl.BlockSpec((C, C), lambda b, t: (0, 0)),               # wpo_y
                pl.BlockSpec((C, 1), lambda b, t: (0, 0)),               # bias
            ],
            out_specs=pl.BlockSpec((None, C, t_hw), lambda b, t: (b, 0, t)),
        ),
        compiler_params=compiler(("parallel", "parallel")),
    )(x, y, w_spa, wpox_b, wpo_y, bias)
    return out.reshape(B, C, H, W)


def fefu_reference(x, y, params):
    """Pure-JAX NCHW reference mirroring the PyTorch forward."""
    w_chn, w_spa = params["w_chn"], params["w_spa"]
    w_po, b_po = params["w_po"], params["b_po"]
    avg = jnp.mean(x, axis=(2, 3))                                  # (B, C)
    chn_att = jax.nn.sigmoid(avg @ w_chn.T)                         # (B, C)
    xs = x * chn_att[:, :, None, None]
    ymax = jnp.max(y, axis=1, keepdims=True)                        # (B,1,H,W)
    ymean = jnp.mean(y, axis=1, keepdims=True)
    spa_att = jax.nn.sigmoid(w_spa[0, 0] * ymax + w_spa[0, 1] * ymean)
    ys = y * spa_att
    cat = jnp.concatenate([xs, ys], axis=1)                         # (B,2C,H,W)
    out = jnp.einsum("oc,bchw->bohw", w_po, cat) + b_po[None, :, None, None]
    return out


if __name__ == "__main__":
    key = jax.random.PRNGKey(0)
    kx, ky, k1, k2, k3, k4 = jax.random.split(key, 6)

    B, C, H, W = 2, 4, 16, 16
    x = jax.random.normal(kx, (B, C, H, W), jnp.float32)
    y = jax.random.normal(ky, (B, C, H, W), jnp.float32)

    # Deterministic synthetic parameters (shapes per module __init__).
    params = {
        "w_chn": 0.1 * jax.random.normal(k1, (C, C), jnp.float32),
        "w_spa": 0.1 * jax.random.normal(k2, (1, 2), jnp.float32),
        "w_po": 0.1 * jax.random.normal(k3, (C, 2 * C), jnp.float32),
        "b_po": 0.1 * jax.random.normal(k4, (C,), jnp.float32),
    }

    ref = fefu_reference(x, y, params)

    # 1) auto path -> fused single-pass kernel at this size (x read once).
    out = fefu_forward(x, y, params)
    jax.block_until_ready(out)
    assert out.shape == (B, C, H, W) and out.dtype == jnp.float32
    assert jnp.allclose(out, ref, atol=1e-4, rtol=1e-4), "fused path mismatch"

    # 2) tiled path (pre-pass channel gate folded into the weight), even split.
    out_t = fefu_forward(x, y, params, force_tiled=True, hw_tile=128)
    jax.block_until_ready(out_t)
    assert jnp.allclose(out_t, ref, atol=1e-4, rtol=1e-4), "tiled path mismatch"

    # 3) tiled path with a partial (masked) last HW block: HW=192, tile=128.
    H2, W2 = 16, 12
    x2 = jax.random.normal(kx, (B, C, H2, W2), jnp.float32)
    y2 = jax.random.normal(ky, (B, C, H2, W2), jnp.float32)
    ref2 = fefu_reference(x2, y2, params)
    out2 = fefu_forward(x2, y2, params, force_tiled=True, hw_tile=128)
    jax.block_until_ready(out2)
    assert jnp.allclose(out2, ref2, atol=1e-4, rtol=1e-4), "partial-block mismatch"

    # 4) bf16 activations arriving from upstream stay bf16 end-to-end
    #    (no wrapper cast; f32 MXU accumulation).
    out_bf = fefu_forward(x.astype(jnp.bfloat16), y.astype(jnp.bfloat16), params)
    jax.block_until_ready(out_bf)
    assert out_bf.dtype == jnp.bfloat16
    assert jnp.allclose(out_bf.astype(jnp.float32), ref, atol=5e-2, rtol=5e-2), \
        "bf16 mismatch vs reference"

    print("KERNEL_OK")
</pallas_src>

<mosaic_0001>
module attributes {stable_mosaic.version = 11 : i64} {
  func.func @fefu_fused_kernel(%arg0: i32, %arg1: memref<1x4x256xf32, #tpu.memory_space<vmem>>, %arg2: memref<1x4x256xf32, #tpu.memory_space<vmem>>, %arg3: memref<4x4xf32, #tpu.memory_space<vmem>>, %arg4: memref<2xf32, #tpu.memory_space<smem>>, %arg5: memref<4x4xf32, #tpu.memory_space<vmem>>, %arg6: memref<4x4xf32, #tpu.memory_space<vmem>>, %arg7: memref<4x1xf32, #tpu.memory_space<vmem>>, %arg8: memref<1x4x256xf32, #tpu.memory_space<vmem>>) attributes {dimension_semantics = [#tpu.dimension_semantics<parallel>], iteration_bounds = array<i64: 2>, scalar_prefetch = 0 : i64, scratch_operands = 0 : i64, tpu.core_type = #tpu.core_type<tc>, window_params = [{transform_indices = @transform_0, window_bounds = array<i64: 1, 4, 256>}, {transform_indices = @transform_1, window_bounds = array<i64: 1, 4, 256>}, {pipeline_mode = #tpu.pipeline_mode<synchronous>, transform_indices = @transform_2, window_bounds = array<i64: 4, 4>}, {transform_indices = @transform_3, window_bounds = array<i64: 2>}, {pipeline_mode = #tpu.pipeline_mode<synchronous>, transform_indices = @transform_4, window_bounds = array<i64: 4, 4>}, {pipeline_mode = #tpu.pipeline_mode<synchronous>, transform_indices = @transform_5, window_bounds = array<i64: 4, 4>}, {pipeline_mode = #tpu.pipeline_mode<synchronous>, transform_indices = @transform_6, window_bounds = array<i64: 4, 1>}, {transform_indices = @transform_7, window_bounds = array<i64: 1, 4, 256>}]} {
    %c0 = arith.constant 0 : index
    %c0_0 = arith.constant 0 : index
    %c0_1 = arith.constant 0 : index
    %0 = vector.load %arg1[%c0, %c0_0, %c0_1] : memref<1x4x256xf32, #tpu.memory_space<vmem>>, vector<1x4x256xf32>
    %1 = vector.shape_cast %0 : vector<1x4x256xf32> to vector<4x256xf32>
    %c0_2 = arith.constant 0 : index
    %c0_3 = arith.constant 0 : index
    %c0_4 = arith.constant 0 : index
    %2 = vector.load %arg2[%c0_2, %c0_3, %c0_4] : memref<1x4x256xf32, #tpu.memory_space<vmem>>, vector<1x4x256xf32>
    %3 = vector.shape_cast %2 : vector<1x4x256xf32> to vector<4x256xf32>
    %cst = arith.constant dense<0.000000e+00> : vector<4xf32>
    %4 = vector.multi_reduction <add>, %1, %cst [1] : vector<4x256xf32> to vector<4xf32>
    %5 = vector.shape_cast %4 : vector<4xf32> to vector<4x1xf32>
    %cst_5 = arith.constant 2.560000e+02 : f32
    %6 = vector.broadcast %cst_5 : f32 to vector<4x1xf32>
    %7 = arith.divf %5, %6 : vector<4x1xf32>
    %c0_6 = arith.constant 0 : index
    %c0_7 = arith.constant 0 : index
    %8 = vector.load %arg3[%c0_6, %c0_7] : memref<4x4xf32, #tpu.memory_space<vmem>>, vector<4x4xf32>
    %9 = vector.broadcast %7 : vector<4x1xf32> to vector<4x4xf32>
    %10 = arith.mulf %8, %9 : vector<4x4xf32>
    %cst_8 = arith.constant dense<0.000000e+00> : vector<4xf32>
    %11 = vector.multi_reduction <add>, %10, %cst_8 [0] : vector<4x4xf32> to vector<4xf32>
    %12 = vector.shape_cast %11 : vector<4xf32> to vector<1x4xf32>
    %13 = arith.negf %12 : vector<1x4xf32>
    %14 = math.exp %13 : vector<1x4xf32>
    %cst_9 = arith.constant 1.000000e+00 : f32
    %15 = vector.broadcast %cst_9 : f32 to vector<1x4xf32>
    %16 = arith.addf %15, %14 : vector<1x4xf32>
    %17 = arith.divf %15, %16 : vector<1x4xf32>
    %c0_10 = arith.constant 0 : index
    %c0_11 = arith.constant 0 : index
    %18 = vector.load %arg5[%c0_10, %c0_11] : memref<4x4xf32, #tpu.memory_space<vmem>>, vector<4x4xf32>
    %19 = vector.broadcast %17 : vector<1x4xf32> to vector<4x4xf32>
    %20 = arith.mulf %18, %19 : vector<4x4xf32>
    %c0_12 = arith.constant 0 : index
    %21 = memref.load %arg4[%c0_12] : memref<2xf32, #tpu.memory_space<smem>>
    %c1 = arith.constant 1 : index
    %22 = memref.load %arg4[%c1] : memref<2xf32, #tpu.memory_space<smem>>
    %cst_13 = arith.constant dense<0xFF800000> : vector<256xf32>
    %23 = vector.multi_reduction <maximumf>, %3, %cst_13 [0] : vector<4x256xf32> to vector<256xf32>
    %24 = vector.shape_cast %23 : vector<256xf32> to vector<1x256xf32>
    %cst_14 = arith.constant dense<0.000000e+00> : vector<256xf32>
    %25 = vector.multi_reduction <add>, %3, %cst_14 [0] : vector<4x256xf32> to vector<256xf32>
    %26 = vector.shape_cast %25 : vector<256xf32> to vector<1x256xf32>
    %cst_15 = arith.constant 4.000000e+00 : f32
    %27 = vector.broadcast %cst_15 : f32 to vector<1x256xf32>
    %28 = arith.divf %26, %27 : vector<1x256xf32>
    %29 = vector.broadcast %21 : f32 to vector<1x256xf32>
    %30 = arith.mulf %29, %24 : vector<1x256xf32>
    %31 = vector.broadcast %22 : f32 to vector<1x256xf32>
    %32 = arith.mulf %31, %28 : vector<1x256xf32>
    %33 = arith.addf %30, %32 : vector<1x256xf32>
    %34 = arith.negf %33 : vector<1x256xf32>
    %35 = math.exp %34 : vector<1x256xf32>
    %cst_16 = arith.constant 1.000000e+00 : f32
    %36 = vector.broadcast %cst_16 : f32 to vector<1x256xf32>
    %37 = arith.addf %36, %35 : vector<1x256xf32>
    %38 = arith.divf %36, %37 : vector<1x256xf32>
    %39 = vector.broadcast %38 : vector<1x256xf32> to vector<4x256xf32>
    %40 = arith.mulf %3, %39 : vector<4x256xf32>
    %cst_17 = arith.constant dense<0.000000e+00> : vector<4x256xf32>
    %41 = tpu.matmul %20, %1, %cst_17 {dimension_numbers = #tpu.dot_dimension_numbers<[1], [0], [0], [1], [0, 0, 1, 1], [], []>} : vector<4x4xf32>, vector<4x256xf32>, vector<4x256xf32> -> vector<4x256xf32>
    %c0_18 = arith.constant 0 : index
    %c0_19 = arith.constant 0 : index
    %42 = vector.load %arg6[%c0_18, %c0_19] : memref<4x4xf32, #tpu.memory_space<vmem>>, vector<4x4xf32>
    %cst_20 = arith.constant dense<0.000000e+00> : vector<4x256xf32>
    %43 = tpu.matmul %42, %40, %cst_20 {dimension_numbers = #tpu.dot_dimension_numbers<[1], [0], [0], [1], [0, 0, 1, 1], [], []>} : vector<4x4xf32>, vector<4x256xf32>, vector<4x256xf32> -> vector<4x256xf32>
    %44 = arith.addf %41, %43 : vector<4x256xf32>
    %c0_21 = arith.constant 0 : index
    %c0_22 = arith.constant 0 : index
    %45 = vector.load %arg7[%c0_21, %c0_22] : memref<4x1xf32, #tpu.memory_space<vmem>>, vector<4x1xf32>
    %46 = vector.broadcast %45 : vector<4x1xf32> to vector<4x256xf32>
    %47 = arith.addf %44, %46 : vector<4x256xf32>
    %c0_23 = arith.constant 0 : index
    %c0_24 = arith.constant 0 : index
    %c0_25 = arith.constant 0 : index
    %48 = vector.load %arg8[%c0_23, %c0_24, %c0_25] : memref<1x4x256xf32, #tpu.memory_space<vmem>>, vector<1x4x256xf32>
    %49 = vector.shape_cast %48 : vector<1x4x256xf32> to vector<4x256xf32>
    %50 = vector.shape_cast %47 : vector<4x256xf32> to vector<1x4x256xf32>
    tpu.vector_store %arg8[%c0_23, %c0_24, %c0_25], %50 {strides = array<i32>} : memref<1x4x256xf32, #tpu.memory_space<vmem>>, vector<1x4x256xf32>,
    return
  }
  func.func @transform_0(%arg0: i32) -> (i32, i32, i32) {
    %c0_i32 = arith.constant 0 : i32
    %c0_i32_0 = arith.constant 0 : i32
    %c0_i32_1 = arith.constant 0 : i32
    return %arg0, %c0_i32, %c0_i32_0 : i32, i32, i32
  }
  func.func @transform_1(%arg0: i32) -> (i32, i32, i32) {
    %c0_i32 = arith.constant 0 : i32
    %c0_i32_0 = arith.constant 0 : i32
    %c0_i32_1 = arith.constant 0 : i32
    return %arg0, %c0_i32, %c0_i32_0 : i32, i32, i32
  }
  func.func @transform_2(%arg0: i32) -> (i32, i32) {
    %c0_i32 = arith.constant 0 : i32
    %c0_i32_0 = arith.constant 0 : i32
    %c0_i32_1 = arith.constant 0 : i32
    return %c0_i32, %c0_i32_0 : i32, i32
  }
  func.func @transform_3(%arg0: i32) -> i32 {
    %c0_i32 = arith.constant 0 : i32
    %c0_i32_0 = arith.constant 0 : i32
    return %c0_i32 : i32
  }
  func.func @transform_4(%arg0: i32) -> (i32, i32) {
    %c0_i32 = arith.constant 0 : i32
    %c0_i32_0 = arith.constant 0 : i32
    %c0_i32_1 = arith.constant 0 : i32
    return %c0_i32, %c0_i32_0 : i32, i32
  }
  func.func @transform_5(%arg0: i32) -> (i32, i32) {
    %c0_i32 = arith.constant 0 : i32
    %c0_i32_0 = arith.constant 0 : i32
    %c0_i32_1 = arith.constant 0 : i32
    return %c0_i32, %c0_i32_0 : i32, i32
  }
  func.func @transform_6(%arg0: i32) -> (i32, i32) {
    %c0_i32 = arith.constant 0 : i32
    %c0_i32_0 = arith.constant 0 : i32
    %c0_i32_1 = arith.constant 0 : i32
    return %c0_i32, %c0_i32_0 : i32, i32
  }
  func.func @transform_7(%arg0: i32) -> (i32, i32, i32) {
    %c0_i32 = arith.constant 0 : i32
    %c0_i32_0 = arith.constant 0 : i32
    %c0_i32_1 = arith.constant 0 : i32
    return %arg0, %c0_i32, %c0_i32_0 : i32, i32, i32
  }
}

</mosaic_0001>

<llo_original>
// kernel: tpu_custom_call.1
$region0: #{tpu_custom_call.1}
  #allocation0 [shape = 'u32[]', space=smem, size = 0x4, offset = 0x4, fixed_abs, tag = 'smem constant byte address 0x4 - core index']
  #allocation1 [shape = 'u32[144,128]{1,0:T(1,128)}', space=vmem, size = 0x12000, scoped, tag = 'internal scratch']
  %s0 = inlined_call_operand.hbm [shape: f32[2,4,256], index: 0, kind: input, shape index: {}]
  %s1 = inlined_call_operand.hbm [shape: f32[2,4,256], index: 1, kind: input, shape index: {}]
  %s2 = inlined_call_operand.vmem [shape: f32[4,4], index: 2, kind: input, shape index: {}]
  %s3 = inlined_call_operand.vmem [shape: f32[2], index: 3, kind: input, shape index: {}]
  %s4 = inlined_call_operand.vmem [shape: f32[4,4], index: 4, kind: input, shape index: {}]
  %s5 = inlined_call_operand.vmem [shape: f32[4,4], index: 5, kind: input, shape index: {}]
  %s6 = inlined_call_operand.vmem [shape: f32[4,1], index: 6, kind: input, shape index: {}]
  %s7 = inlined_call_operand.hbm [shape: f32[2,4,256], index: 7, kind: output, shape index: {}]
  %s8 = sld [smem:[#allocation0]]
  $region73: #{tpu_custom_call.1} parent=0
    _
  %s10 = ssub.s32 1, %s8
  %s11 = scalar_select 0, %s10, %s8
  $region1: #{tpu_custom_call.1} parent=0
    #allocation2 [shape = 'u8[8192]{0}', space=vmem, size = 0x2000, scoped, tag = 'input window, operand 0']
    #allocation3 [shape = 's32[2]{0}', space=sflag, size = 0x8, scoped, tag = 'scoped memory for tpu_custom_call.1']
    #allocation4 [shape = 's32[2]{0}', space=sflag, size = 0x8, scoped, tag = 'scoped memory for tpu_custom_call.1']
    #allocation5 [shape = 's32[2]{0}', space=sflag, size = 0x8, scoped, tag = 'scoped memory for tpu_custom_call.1']
    #allocation6 [shape = 'u8[8192]{0}', space=vmem, size = 0x2000, scoped, tag = 'input window, operand 1']
    #allocation7 [shape = 's32[2]{0}', space=sflag, size = 0x8, scoped, tag = 'scoped memory for tpu_custom_call.1']
    #allocation8 [shape = 'u8[512]{0}', space=smem, size = 0x200, scoped, tag = 'input window, operand 3, single buffered']
    #allocation9 [shape = 'u8[8192]{0}', space=vmem, size = 0x2000, scoped, tag = 'output window, operand 0']
    %12 = vsyncpa [#allocation3], 0
    %s13 = scalar_lea.sflag [#allocation3], 1
    %14 = vsyncpa %s13, 0
    %15 = vsyncpa [#allocation7], 0
    %s16 = scalar_lea.sflag [#allocation7], 1
    %17 = vsyncpa %s16, 0
    %18 = vsyncpa [#allocation5], 0
    %19 = vsyncpa [#allocation4], 0
    %s20 = scalar_lea.sflag [#allocation4], 1
    %21 = vsyncpa %s20, 0
    loop: start=0, step=1, limit=4
    $region2: #{tpu_custom_call.1} parent=1 // loop_pre_header
      _
    $region3: #{tpu_custom_call.1} parent=1 // loop_header
      %s23 = sphi 0, %s27
      %p24 = scmp.ge.s32.totalorder %s23, 4
      %s33 = sphi 0, %s35
      %s36 = sphi 0, %s33
      %s37 = sphi 0, %s36
      %s53 = sphi 0, %s37
      %s59 = sphi 0, %s61
      %s62 = sphi 0, %s59
      %s63 = sphi 0, %s62
      %s79 = sphi 0, %s63
      %s83 = sphi 0, %s83
      %s85 = sphi 0, %s83
      %s86 = sphi 0, %s85
      %s100 = sphi 0, %s86
      %s104 = sphi 0, %s104
      %s106 = sphi 0, %s104
      %s107 = sphi 0, %s106
      %s121 = sphi 0, %s107
      %s125 = sphi 0, %s125
      %s127 = sphi 0, %s125
      %s128 = sphi 0, %s127
      %s142 = sphi 0, %s128
      %s146 = sphi 0, %s146
      %s148 = sphi 0, %s146
      %s149 = sphi 0, %s148
      %s163 = sphi 0, %s149
      %s167 = sphi 0, %s167
      %s169 = sphi 0, %s167
      %s170 = sphi 0, %s169
      %s184 = sphi 0, %s170
      %s190 = sphi 0, %s192
      %s193 = sphi 0, %s190
      %s194 = sphi 0, %s193
      %s210 = sphi 0, %s194
    $region4: #{tpu_custom_call.1} parent=1 // loop_header_branch
      %26 = sbr.rel (%p24) target = $region8
    $region5: #{tpu_custom_call.1} parent=1 // loop_body
      %s28 = ssub.s32 %s23, 1
      %s29 = ssub.s32 %s23, 2
      %s30 = sadd.s32 %s23, 1
      %s31 = ssub.s32 %s23, %s30
      %p32 = scmp.eq.s32.totalorder %s31, 0
      %s34 = sadd.s32 %s33, 1
      %s35 = scalar_select %p32, %s33, %s34
      %p38 = pneg %p32
      %p39 = scmp.eq.s32.totalorder %s23, 1
      %p40 = por %p38, %p39
      %p41 = scmp.ne.s32.totalorder %s33, %s36
      %p42 = scmp.eq.s32.totalorder %s23, 0
      %p43 = por %p41, %p42
      %p44 = scmp.ne.s32.totalorder %s33, %s36
      %p45 = scmp.eq.s32.totalorder %s28, 1
      %p46 = por %p44, %p45
      %p47 = scmp.ne.s32.totalorder %s36, %s37
      %p48 = scmp.eq.s32.totalorder %s28, 0
      %p49 = por %p47, %p48
      %p50 = scmp.ne.s32.totalorder %s36, %s37
      %p51 = scmp.eq.s32.totalorder %s29, 1
      %p52 = por %p50, %p51
      %p54 = scmp.ne.s32.totalorder %s37, %s53
      %p55 = scmp.eq.s32.totalorder %s29, 0
      %p56 = por %p54, %p55
      %s57 = ssub.s32 %s23, %s30
      %p58 = scmp.eq.s32.totalorder %s57, 0
      %s60 = sadd.s32 %s59, 1
      %s61 = scalar_select %p58, %s59, %s60
      %p64 = pneg %p58
      %p65 = scmp.eq.s32.totalorder %s23, 1
      %p66 = por %p64, %p65
      %p67 = scmp.ne.s32.totalorder %s59, %s62
      %p68 = scmp.eq.s32.totalorder %s23, 0
      %p69 = por %p67, %p68
      %p70 = scmp.ne.s32.totalorder %s59, %s62
      %p71 = scmp.eq.s32.totalorder %s28, 1
      %p72 = por %p70, %p71
      %p73 = scmp.ne.s32.totalorder %s62, %s63
      %p74 = scmp.eq.s32.totalorder %s28, 0
      %p75 = por %p73, %p74
      %p76 = scmp.ne.s32.totalorder %s62, %s63
      %p77 = scmp.eq.s32.totalorder %s29, 1
      %p78 = por %p76, %p77
      %p80 = scmp.ne.s32.totalorder %s63, %s79
      %p81 = scmp.eq.s32.totalorder %s29, 0
      %p82 = por %p80, %p81
      %s84 = sadd.s32 %s83, 1
      %p87 = scmp.eq.s32.totalorder %s23, 1
      %p88 = scmp.ne.s32.totalorder %s83, %s85
      %p89 = scmp.eq.s32.totalorder %s23, 0
      %p90 = por %p88, %p89
      %p91 = scmp.ne.s32.totalorder %s83, %s85
      %p92 = scmp.eq.s32.totalorder %s28, 1
      %p93 = por %p91, %p92
      %p94 = scmp.ne.s32.totalorder %s85, %s86
      %p95 = scmp.eq.s32.totalorder %s28, 0
      %p96 = por %p94, %p95
      %p97 = scmp.ne.s32.totalorder %s85, %s86
      %p98 = scmp.eq.s32.totalorder %s29, 1
      %p99 = por %p97, %p98
      %p101 = scmp.ne.s32.totalorder %s86, %s100
      %p102 = scmp.eq.s32.totalorder %s29, 0
      %p103 = por %p101, %p102
      %s105 = sadd.s32 %s104, 1
      %p108 = scmp.eq.s32.totalorder %s23, 1
      %p109 = scmp.ne.s32.totalorder %s104, %s106
      %p110 = scmp.eq.s32.totalorder %s23, 0
      %p111 = por %p109, %p110
      %p112 = scmp.ne.s32.totalorder %s104, %s106
      %p113 = scmp.eq.s32.totalorder %s28, 1
      %p114 = por %p112, %p113
      %p115 = scmp.ne.s32.totalorder %s106, %s107
      %p116 = scmp.eq.s32.totalorder %s28, 0
      %p117 = por %p115, %p116
      %p118 = scmp.ne.s32.totalorder %s106, %s107
      %p119 = scmp.eq.s32.totalorder %s29, 1
      %p120 = por %p118, %p119
      %p122 = scmp.ne.s32.totalorder %s107, %s121
      %p123 = scmp.eq.s32.totalorder %s29, 0
      %p124 = por %p122, %p123
      %s126 = sadd.s32 %s125, 1
      %p129 = scmp.eq.s32.totalorder %s23, 1
      %p130 = scmp.ne.s32.totalorder %s125, %s127
      %p131 = scmp.eq.s32.totalorder %s23, 0
      %p132 = por %p130, %p131
      %p133 = scmp.ne.s32.totalorder %s125, %s127
      %p134 = scmp.eq.s32.totalorder %s28, 1
      %p135 = por %p133, %p134
      %p136 = scmp.ne.s32.totalorder %s127, %s128
      %p137 = scmp.eq.s32.totalorder %s28, 0
      %p138 = por %p136, %p137
      %p139 = scmp.ne.s32.totalorder %s127, %s128
      %p140 = scmp.eq.s32.totalorder %s29, 1
      %p141 = por %p139, %p140
      %p143 = scmp.ne.s32.totalorder %s128, %s142
      %p144 = scmp.eq.s32.totalorder %s29, 0
      %p145 = por %p143, %p144
      %s147 = sadd.s32 %s146, 1
      %p150 = scmp.eq.s32.totalorder %s23, 1
      %p151 = scmp.ne.s32.totalorder %s146, %s148
      %p152 = scmp.eq.s32.totalorder %s23, 0
      %p153 = por %p151, %p152
      %p154 = scmp.ne.s32.totalorder %s146, %s148
      %p155 = scmp.eq.s32.totalorder %s28, 1
      %p156 = por %p154, %p155
      %p157 = scmp.ne.s32.totalorder %s148, %s149
      %p158 = scmp.eq.s32.totalorder %s28, 0
      %p159 = por %p157, %p158
      %p160 = scmp.ne.s32.totalorder %s148, %s149
      %p161 = scmp.eq.s32.totalorder %s29, 1
      %p162 = por %p160, %p161
      %p164 = scmp.ne.s32.totalorder %s149, %s163
      %p165 = scmp.eq.s32.totalorder %s29, 0
      %p166 = por %p164, %p165
      %s168 = sadd.s32 %s167, 1
      %p171 = scmp.eq.s32.totalorder %s23, 1
      %p172 = scmp.ne.s32.totalorder %s167, %s169
      %p173 = scmp.eq.s32.totalorder %s23, 0
      %p174 = por %p172, %p173
      %p175 = scmp.ne.s32.totalorder %s167, %s169
      %p176 = scmp.eq.s32.totalorder %s28, 1
      %p177 = por %p175, %p176
      %p178 = scmp.ne.s32.totalorder %s169, %s170
      %p179 = scmp.eq.s32.totalorder %s28, 0
      %p180 = por %p178, %p179
      %p181 = scmp.ne.s32.totalorder %s169, %s170
      %p182 = scmp.eq.s32.totalorder %s29, 1
      %p183 = por %p181, %p182
      %p185 = scmp.ne.s32.totalorder %s170, %s184
      %p186 = scmp.eq.s32.totalorder %s29, 0
      %p187 = por %p185, %p186
      %s188 = ssub.s32 %s23, %s30
      %p189 = scmp.eq.s32.totalorder %s188, 0
      %s191 = sadd.s32 %s190, 1
      %s192 = scalar_select %p189, %s190, %s191
      %p195 = pneg %p189
      %p196 = scmp.eq.s32.totalorder %s23, 1
      %p197 = por %p195, %p196
      %p198 = scmp.ne.s32.totalorder %s190, %s193
      %p199 = scmp.eq.s32.totalorder %s23, 0
      %p200 = por %p198, %p199
      %p201 = scmp.ne.s32.totalorder %s190, %s193
      %p202 = scmp.eq.s32.totalorder %s28, 1
      %p203 = por %p201, %p202
      %p204 = scmp.ne.s32.totalorder %s193, %s194
      %p205 = scmp.eq.s32.totalorder %s28, 0
      %p206 = por %p204, %p205
      %p207 = scmp.ne.s32.totalorder %s193, %s194
      %p208 = scmp.eq.s32.totalorder %s29, 1
      %p209 = por %p207, %p208
      %p211 = scmp.ne.s32.totalorder %s194, %s210
      %p212 = scmp.eq.s32.totalorder %s29, 0
      %p213 = por %p211, %p212
      %p214 = scmp.le.s32.totalorder 1, %s23
      %p215 = scmp.lt.s32.totalorder %s23, 3
      %p216 = pnand %p214, %p215
      %p217 = pneg %p216
      // Predicated region
      $region9: #{tpu_custom_call.1} parent=5 // pred_check
        _
      $region10: #{tpu_custom_call.1} parent=5 // pred_check_branch
        %219 = sbr.rel (%p216) target = $region12
      $region11: #{tpu_custom_call.1} parent=5 // pred_region
        %s220 = ssub.s32 %s23, 1
        // Predicated region
        $region13: #{tpu_custom_call.1} parent=11 // pred_check
          %p221 = pneg %p96
        $region14: #{tpu_custom_call.1} parent=11 // pred_check_branch
          %223 = sbr.rel (%p221) target = $region16
        $region15: #{tpu_custom_call.1} parent=11 // pred_region
          _
        $region16: #{tpu_custom_call.1} parent=11 // pred_fallthru
          _
        // Predicated region
        $region17: #{tpu_custom_call.1} parent=11 // pred_check
          %p224 = pneg %p117
        $region18: #{tpu_custom_call.1} parent=11 // pred_check_branch
          %226 = sbr.rel (%p224) target = $region20
        $region19: #{tpu_custom_call.1} parent=11 // pred_region
          %s228 = ssub.s32 16, 16
          %229 = vsyncadd [#allocation5], %s228
          %s231 = sshll.u32 %s3, 4
          %s232 = int_to_ptr.vmem [resolvable:$true] %s231
          %234 = dma.vmem_to_smem %s232, 16, [#allocation8], [#allocation5]
        $region20: #{tpu_custom_call.1} parent=11 // pred_fallthru
          _
        // Predicated region
        $region21: #{tpu_custom_call.1} parent=11 // pred_check
          %p235 = pneg %p138
        $region22: #{tpu_custom_call.1} parent=11 // pred_check_branch
          %237 = sbr.rel (%p235) target = $region24
        $region23: #{tpu_custom_call.1} parent=11 // pred_region
          _
        $region24: #{tpu_custom_call.1} parent=11 // pred_fallthru
          _
        // Predicated region
        $region25: #{tpu_custom_call.1} parent=11 // pred_check
          %p238 = pneg %p159
        $region26: #{tpu_custom_call.1} parent=11 // pred_check_branch
          %240 = sbr.rel (%p238) target = $region28
        $region27: #{tpu_custom_call.1} parent=11 // pred_region
          _
        $region28: #{tpu_custom_call.1} parent=11 // pred_fallthru
          _
        // Predicated region
        $region29: #{tpu_custom_call.1} parent=11 // pred_check
          %p241 = pneg %p180
        $region30: #{tpu_custom_call.1} parent=11 // pred_check_branch
          %243 = sbr.rel (%p241) target = $region32
        $region31: #{tpu_custom_call.1} parent=11 // pred_region
          _
        $region32: #{tpu_custom_call.1} parent=11 // pred_fallthru
          _
      $region12: #{tpu_custom_call.1} parent=5 // pred_fallthru
        _
      %p244 = scmp.lt.s32.totalorder %s23, 2
      // Predicated region
      $region33: #{tpu_custom_call.1} parent=5 // pred_check
        %p245 = pneg %p244
      $region34: #{tpu_custom_call.1} parent=5 // pred_check_branch
        %247 = sbr.rel (%p245) target = $region36
      $region35: #{tpu_custom_call.1} parent=5 // pred_region
        // Predicated region
        $region37: #{tpu_custom_call.1} parent=35 // pred_check
          %p248 = pneg %p43
        $region38: #{tpu_custom_call.1} parent=35 // pred_check_branch
          %250 = sbr.rel (%p248) target = $region40
        $region39: #{tpu_custom_call.1} parent=35 // pred_region
          %s251 = sand.u32 %s33, 1
          %s252 = scalar_lea.sflag [#allocation3], %s251
          %s253 = sand.u32 %s33, 1
          %s254 = smul.addr %s253, 8
          %s255 = scalar_lea.vmem [#allocation2], %s254
          %s257 = ssub.s32 128, 128
          %258 = vsyncadd %s252, %s257
          %s259 = smul.addr %s23, 2
          %s260 = smul.addr %s259, 64
          %s261 = scalar_lea.hbm %s0, %s260
          %s263 = sshll.u32 %s255, 4
          %s264 = int_to_ptr.vmem [resolvable:$true] %s263
          %266 = dma.hbm_to_vmem [thread:$0]  %s261, 128, %s264, %s252
        $region40: #{tpu_custom_call.1} parent=35 // pred_fallthru
          _
        // Predicated region
        $region41: #{tpu_custom_call.1} parent=35 // pred_check
          %p267 = pneg %p69
        $region42: #{tpu_custom_call.1} parent=35 // pred_check_branch
          %269 = sbr.rel (%p267) target = $region44
        $region43: #{tpu_custom_call.1} parent=35 // pred_region
          %s270 = sand.u32 %s59, 1
          %s271 = scalar_lea.sflag [#allocation7], %s270
          %s272 = sand.u32 %s59, 1
          %s273 = smul.addr %s272, 8
          %s274 = scalar_lea.vmem [#allocation6], %s273
          %s276 = ssub.s32 128, 128
          %277 = vsyncadd %s271, %s276
          %s278 = smul.addr %s23, 2
          %s279 = smul.addr %s278, 64
          %s280 = scalar_lea.hbm %s1, %s279
          %s282 = sshll.u32 %s274, 4
          %s283 = int_to_ptr.vmem [resolvable:$true] %s282
          %285 = dma.hbm_to_vmem [thread:$0]  %s280, 128, %s283, %s271
        $region44: #{tpu_custom_call.1} parent=35 // pred_fallthru
          _
      $region36: #{tpu_custom_call.1} parent=5 // pred_fallthru
        _
      %p286 = scmp.le.s32.totalorder 1, %s23
      %p287 = scmp.lt.s32.totalorder %s23, 3
      %p288 = pnand %p286, %p287
      %p289 = pneg %p288
      // Predicated region
      $region45: #{tpu_custom_call.1} parent=5 // pred_check
        _
      $region46: #{tpu_custom_call.1} parent=5 // pred_check_branch
        %291 = sbr.rel (%p288) target = $region48
      $region47: #{tpu_custom_call.1} parent=5 // pred_region
        %s292 = ssub.s32 %s23, 1
        %s293 = sand.u32 %s36, 1
        %s294 = scalar_lea.sflag [#allocation3], %s293
        %s295 = sand.u32 %s36, 1
        %s296 = smul.addr %s295, 8
        %s297 = scalar_lea.vmem [#allocation2], %s296
        // Predicated region
        $region49: #{tpu_custom_call.1} parent=47 // pred_check
          %p298 = pneg %p49
        $region50: #{tpu_custom_call.1} parent=47 // pred_check_branch
          %300 = sbr.rel (%p298) target = $region52
        $region51: #{tpu_custom_call.1} parent=47 // pred_region
          %301 = dma.done %s294, 128
        $region52: #{tpu_custom_call.1} parent=47 // pred_fallthru
          _
        %s302 = sand.u32 %s62, 1
        %s303 = scalar_lea.sflag [#allocation7], %s302
        %s304 = sand.u32 %s62, 1
        %s305 = smul.addr %s304, 8
        %s306 = scalar_lea.vmem [#allocation6], %s305
        // Predicated region
        $region53: #{tpu_custom_call.1} parent=47 // pred_check
          %p307 = pneg %p75
        $region54: #{tpu_custom_call.1} parent=47 // pred_check_branch
          %309 = sbr.rel (%p307) target = $region56
        $region55: #{tpu_custom_call.1} parent=47 // pred_region
          %310 = dma.done %s303, 128
        $region56: #{tpu_custom_call.1} parent=47 // pred_fallthru
          _
        // Predicated region
        $region57: #{tpu_custom_call.1} parent=47 // pred_check
          %p311 = pneg %p117
        $region58: #{tpu_custom_call.1} parent=47 // pred_check_branch
          %313 = sbr.rel (%p311) target = $region60
        $region59: #{tpu_custom_call.1} parent=47 // pred_region
          %314 = dma.done [#allocation5], 16
        $region60: #{tpu_custom_call.1} parent=47 // pred_fallthru
          _
        %315 = sfence
        %s316 = sand.u32 %s36, 1
        %s317 = scalar_lea.sflag [#allocation3], %s316
        %s318 = sand.u32 %s36, 1
        %s319 = smul.addr %s318, 8
        %s320 = scalar_lea.vmem [#allocation2], %s319
        %p321 = pneg %p49
        %p322 = pneg %p46
        %s323 = sand.u32 %s62, 1
        %s324 = scalar_lea.sflag [#allocation7], %s323
        %s325 = sand.u32 %s62, 1
        %s326 = smul.addr %s325, 8
        %s327 = scalar_lea.vmem [#allocation6], %s326
        %p328 = pneg %p75
        %p329 = pneg %p72
        %p330 = pneg %p96
        %p331 = pneg %p93
        %p332 = pneg %p117
        %p333 = pneg %p114
        %p334 = pneg %p138
        %p335 = pneg %p135
        %p336 = pneg %p159
        %p337 = pneg %p156
        %p338 = pneg %p180
        %p339 = pneg %p177
        %p340 = pneg %p206
        %p341 = pneg %p203
        %s342 = sand.u32 %s193, 1
        %s343 = scalar_lea.sflag [#allocation4], %s342
        %s344 = sand.u32 %s193, 1
        %s345 = smul.addr %s344, 8
        %s346 = scalar_lea.vmem [#allocation9], %s345
        %v347 = vld [vmem:[%s297] sm:$0xff]
        %v348 = vld [vmem:[%s306] sm:$0xff]
        %v350 = vcombine.high %v347, %v347
        %vm352 = vcmask 1043456
        %v353 = vsel %vm352, %v347, 0.0
        %v354 = vsel %vm352, %v350, 0.0
        %v355 = vadd.f32 %v353, %v354
        %356 = vadd.xlane.f32.xlu0 %v355
        %v357 = vpop.xlane.xlu0 %356
        %v358 = vrcp.pop 256.0
        %v359 = vmul.f32 %v357, %v358
        %v360 = vld [vmem:[%s2] sm:$0xf]
        %v361 = vmul.f32 %v360, %v359
        %vm362 = vcmask 27648
        %v363 = vsel %vm362, %v361, 0.0
        %v364 = vrot.slane %v363, 4
        %v365 = vadd.f32 %v363, %v364
        %v366 = vrot.slane %v365, 2
        %v367 = vadd.f32 %v365, %v366
        %v368 = vrot.slane %v367, 1
        %v369 = vadd.f32 %v367, %v368
        %v370 = vxor.u32 %v369, 2147483648
        %v371 = vmul.f32 %v370, 1.442695
        %v372 = vpow.pop %v371
        %v373 = vadd.f32 %v372, 1.0
        %v374 = vrcp.pop %v373
        %v375 = vmul.f32 1.0, %v374
        %v376 = vld [vmem:[%s4] sm:$0xf]
        %v377 = vmul.f32 %v376, %v375
        %s378 = sld [smem:[#allocation8]]
        %s379 = sld [smem:[#allocation8 + $0x1]]
        %v381 = vcombine.high %v348, %v348
        %v383 = vsel %vm352, %v348, -inf
        %v384 = vrot.slane %v383, 4
        %v385 = vmax.f32 %v383, %v384
        %v386 = vrot.slane %v385, 2
        %v387 = vmax.f32 %v385, %v386
        %v388 = vrot.slane %v387, 1
        %v389 = vmax.f32 %v387, %v388
        %v390 = vsel %vm352, %v381, -inf
        %v391 = vrot.slane %v390, 4
        %v392 = vmax.f32 %v390, %v391
        %v393 = vrot.slane %v392, 2
        %v394 = vmax.f32 %v392, %v393
        %v395 = vrot.slane %v394, 1
        %v396 = vmax.f32 %v394, %v395
        %v397 = vsel %vm352, %v348, 0.0
        %v398 = vrot.slane %v397, 4
        %v399 = vadd.f32 %v397, %v398
        %v400 = vrot.slane %v399, 2
        %v401 = vadd.f32 %v399, %v400
        %v402 = vrot.slane %v401, 1
        %v403 = vadd.f32 %v401, %v402
        %v404 = vsel %vm352, %v381, 0.0
        %v405 = vrot.slane %v404, 4
        %v406 = vadd.f32 %v404, %v405
        %v407 = vrot.slane %v406, 2
        %v408 = vadd.f32 %v406, %v407
        %v409 = vrot.slane %v408, 1
        %v410 = vadd.f32 %v408, %v409
        %v411 = vrcp.pop 4.0
        %v412 = vmul.f32 %v403, %v411
        %v413 = vmul.f32 %v410, %v411
        %v414 = vstv %s378
        %v415 = vmul.f32 %v414, %v389
        %v416 = vmul.f32 %v414, %v396
        %v417 = vstv %s379
        %v418 = vmul.f32 %v417, %v412
        %v419 = vmul.f32 %v417, %v413
        %v420 = vadd.f32 %v415, %v418
        %v421 = vadd.f32 %v416, %v419
        %v422 = vxor.u32 %v420, 2147483648
        %v423 = vxor.u32 %v421, 2147483648
        %v424 = vmul.f32 %v422, 1.442695
        %v425 = vpow.pop %v424
        %v426 = vmul.f32 %v423, 1.442695
        %v427 = vpow.pop %v426
        %v428 = vadd.f32 %v425, 1.0
        %v429 = vadd.f32 %v427, 1.0
        %v430 = vrcp.pop %v428
        %v431 = vmul.f32 1.0, %v430
        %v432 = vrcp.pop %v429
        %v433 = vmul.f32 1.0, %v432
        %v436 = vcombine.low %v431, %v433
        %v438 = vmul.f32 %v348, %v436
        %v439 = vld [vmem:[%s5] sm:$0xf]
        %v441 = vcombine.high %v438, %v438
        %vm442 = vcmask 31744
        %v444 = vsel %vm442, %v439, 0
        %v446 = vsel %vm352, %v438, 0
        %v448 = vsel %vm352, %v441, 0
        %450 = vmatprep.subr.mxu0 %v448
        %451 = vmatpush1.msra.mxu0 %v446
        %452 = vmatprep.subr.mxu0 0.0
        %453 = vmatpush1.msra.mxu0 0.0
        %454 = vmatprep.subr.mxu0 0.0
        %455 = vmatpush1.msra.mxu0 0.0
        %456 = vmatprep.subr.mxu0 0.0
        %457 = vmatpush1.msra.mxu0 0.0
        %458 = vmatprep.subr.mxu0 0.0
        %459 = vmatpush1.msra.mxu0 0.0
        %460 = vmatprep.subr.mxu0 0.0
        %461 = vmatpush1.msra.mxu0 0.0
        %462 = vmatprep.subr.mxu0 0.0
        %463 = vmatpush1.msra.mxu0 0.0
        %464 = vmatprep.subr.mxu0 0.0
        %465 = vmatpush1.msra.mxu0 0.0
        %466 = vmatprep.subr.mxu0 0.0
        %467 = vmatpush1.msra.mxu0 0.0
        %468 = vmatprep.subr.mxu0 0.0
        %469 = vmatpush1.msra.mxu0 0.0
        %470 = vmatprep.subr.mxu0 0.0
        %471 = vmatpush1.msra.mxu0 0.0
        %472 = vmatprep.subr.mxu0 0.0
        %473 = vmatpush1.msra.mxu0 0.0
        %474 = vmatprep.subr.mxu0 0.0
        %475 = vmatpush1.msra.mxu0 0.0
        %476 = vmatprep.subr.mxu0 0.0
        %477 = vmatpush1.msra.mxu0 0.0
        %478 = vmatprep.subr.mxu0 0.0
        %479 = vmatpush1.msra.mxu0 0.0
        %480 = vmatprep.subr.mxu0 0.0
        %481 = vmatpush1.msra.mxu0 0.0
        %482 = vmatprep.subr.mxu0 0.0
        %483 = vmatpush1.msra.mxu0 0.0
        %484 = vmatprep.subr.mxu0 0.0
        %485 = vmatpush1.msra.mxu0 0.0
        %486 = vmatprep.subr.mxu0 0.0
        %487 = vmatpush1.msra.mxu0 0.0
        %488 = vmatprep.subr.mxu0 0.0
        %489 = vmatpush1.msra.mxu0 0.0
        %490 = vmatprep.subr.mxu0 0.0
        %491 = vmatpush1.msra.mxu0 0.0
        %492 = vmatprep.subr.mxu0 0.0
        %493 = vmatpush1.msra.mxu0 0.0
        %494 = vmatprep.subr.mxu0 0.0
        %495 = vmatpush1.msra.mxu0 0.0
        %496 = vmatprep.subr.mxu0 0.0
        %497 = vmatpush1.msra.mxu0 0.0
        %498 = vmatprep.subr.mxu0 0.0
        %499 = vmatpush1.msra.mxu0 0.0
        %500 = vmatprep.subr.mxu0 0.0
        %501 = vmatpush1.msra.mxu0 0.0
        %502 = vmatprep.subr.mxu0 0.0
        %503 = vmatpush1.msra.mxu0 0.0
        %504 = vmatprep.subr.mxu0 0.0
        %505 = vmatpush1.msra.mxu0 0.0
        %506 = vmatprep.subr.mxu0 0.0
        %507 = vmatpush1.msra.mxu0 0.0
        %508 = vmatprep.subr.mxu0 0.0
        %509 = vmatpush1.msra.mxu0 0.0
        %510 = vmatprep.subr.mxu0 0.0
        %511 = vmatpush1.msra.mxu0 0.0
        %512 = vmatprep.subr.mxu0 0.0
        %513 = vmatpush1.msra.mxu0 0.0
        %514 = vmatprep.mubr.f32.mxu0 0.0
        %515 = vmatmul.mubr.f32.gmra.mrb[0].mxu0 %v444
        %v516 = vpop.f32.mrb[0].mxu0
        %v517 = vadd.f32 0.0, %v516
        %v518 = vpop.f32.mrb[0].mxu0
        %v519 = vadd.f32 0.0, %v518
        %520 = vdwg.mxu0
        %v522 = vsel %vm442, %v377, 0
        %v524 = vsel %vm352, %v347, 0
        %v526 = vsel %vm352, %v350, 0
        %528 = vmatprep.subr.mxu0 %v526
        %529 = vmatpush1.msra.mxu0 %v524
        %530 = vmatprep.subr.mxu0 0.0
        %531 = vmatpush1.msra.mxu0 0.0
        %532 = vmatprep.subr.mxu0 0.0
        %533 = vmatpush1.msra.mxu0 0.0
        %534 = vmatprep.subr.mxu0 0.0
        %535 = vmatpush1.msra.mxu0 0.0
        %536 = vmatprep.subr.mxu0 0.0
        %537 = vmatpush1.msra.mxu0 0.0
        %538 = vmatprep.subr.mxu0 0.0
        %539 = vmatpush1.msra.mxu0 0.0
        %540 = vmatprep.subr.mxu0 0.0
        %541 = vmatpush1.msra.mxu0 0.0
        %542 = vmatprep.subr.mxu0 0.0
        %543 = vmatpush1.msra.mxu0 0.0
        %544 = vmatprep.subr.mxu0 0.0
        %545 = vmatpush1.msra.mxu0 0.0
        %546 = vmatprep.subr.mxu0 0.0
        %547 = vmatpush1.msra.mxu0 0.0
        %548 = vmatprep.subr.mxu0 0.0
        %549 = vmatpush1.msra.mxu0 0.0
        %550 = vmatprep.subr.mxu0 0.0
        %551 = vmatpush1.msra.mxu0 0.0
        %552 = vmatprep.subr.mxu0 0.0
        %553 = vmatpush1.msra.mxu0 0.0
        %554 = vmatprep.subr.mxu0 0.0
        %555 = vmatpush1.msra.mxu0 0.0
        %556 = vmatprep.subr.mxu0 0.0
        %557 = vmatpush1.msra.mxu0 0.0
        %558 = vmatprep.subr.mxu0 0.0
        %559 = vmatpush1.msra.mxu0 0.0
        %560 = vmatprep.subr.mxu0 0.0
        %561 = vmatpush1.msra.mxu0 0.0
        %562 = vmatprep.subr.mxu0 0.0
        %563 = vmatpush1.msra.mxu0 0.0
        %564 = vmatprep.subr.mxu0 0.0
        %565 = vmatpush1.msra.mxu0 0.0
        %566 = vmatprep.subr.mxu0 0.0
        %567 = vmatpush1.msra.mxu0 0.0
        %568 = vmatprep.subr.mxu0 0.0
        %569 = vmatpush1.msra.mxu0 0.0
        %570 = vmatprep.subr.mxu0 0.0
        %571 = vmatpush1.msra.mxu0 0.0
        %572 = vmatprep.subr.mxu0 0.0
        %573 = vmatpush1.msra.mxu0 0.0
        %574 = vmatprep.subr.mxu0 0.0
        %575 = vmatpush1.msra.mxu0 0.0
        %576 = vmatprep.subr.mxu0 0.0
        %577 = vmatpush1.msra.mxu0 0.0
        %578 = vmatprep.subr.mxu0 0.0
        %579 = vmatpush1.msra.mxu0 0.0
        %580 = vmatprep.subr.mxu0 0.0
        %581 = vmatpush1.msra.mxu0 0.0
        %582 = vmatprep.subr.mxu0 0.0
        %583 = vmatpush1.msra.mxu0 0.0
        %584 = vmatprep.subr.mxu0 0.0
        %585 = vmatpush1.msra.mxu0 0.0
        %586 = vmatprep.subr.mxu0 0.0
        %587 = vmatpush1.msra.mxu0 0.0
        %588 = vmatprep.subr.mxu0 0.0
        %589 = vmatpush1.msra.mxu0 0.0
        %590 = vmatprep.subr.mxu0 0.0
        %591 = vmatpush1.msra.mxu0 0.0
        %592 = vmatprep.mubr.f32.mxu0 0.0
        %593 = vmatmul.mubr.f32.gmra.mrb[0].mxu0 %v522
        %v594 = vpop.f32.mrb[0].mxu0
        %v595 = vadd.f32 %v517, %v594
        %v596 = vpop.f32.mrb[0].mxu0
        %v597 = vadd.f32 %v519, %v596
        %598 = vdwg.mxu0
        %v599 = vld [vmem:[%s6] sm:$0xf]
        %601 = vset.pattern.permute.xlu0 0
        %602 = vperm.xlu0 %601, %v599
        %v603 = vpop.permute.xlu0 %602
        %v605 = vadd.f32 %v595, %v603
        %v606 = vadd.f32 %v597, %v603
        %v609 = vcombine.low %v605, %v606
        %611 = vst [vmem:[%s346] sm:$0xff] %v609
        %s612 = sand.u32 %s193, 1
        %s613 = scalar_lea.sflag [#allocation4], %s612
        %s614 = sand.u32 %s193, 1
        %s615 = smul.addr %s614, 8
        %s616 = scalar_lea.vmem [#allocation9], %s615
        // Predicated region
        $region61: #{tpu_custom_call.1} parent=47 // pred_check
          %p617 = pneg %p203
        $region62: #{tpu_custom_call.1} parent=47 // pred_check_branch
          %619 = sbr.rel (%p617) target = $region64
        $region63: #{tpu_custom_call.1} parent=47 // pred_region
          %s621 = ssub.s32 128, 128
          %622 = vsyncadd %s613, %s621
          %s623 = smul.addr %s28, 2
          %s624 = smul.addr %s623, 64
          %s625 = scalar_lea.hbm %s7, %s624
          %s627 = sshll.u32 %s616, 4
          %s628 = int_to_ptr.vmem [resolvable:$true] %s627
          %630 = dma.vmem_to_hbm [thread:$0]  %s628, 128, %s625, %s613
        $region64: #{tpu_custom_call.1} parent=47 // pred_fallthru
          _
      $region48: #{tpu_custom_call.1} parent=5 // pred_fallthru
        _
      %p631 = scmp.le.s32.totalorder 2, %s23
      // Predicated region
      $region65: #{tpu_custom_call.1} parent=5 // pred_check
        %p632 = pneg %p631
      $region66: #{tpu_custom_call.1} parent=5 // pred_check_branch
        %634 = sbr.rel (%p632) target = $region68
      $region67: #{tpu_custom_call.1} parent=5 // pred_region
        %s635 = ssub.s32 %s23, 2
        // Predicated region
        $region69: #{tpu_custom_call.1} parent=67 // pred_check
          %p636 = pneg %p209
        $region70: #{tpu_custom_call.1} parent=67 // pred_check_branch
          %638 = sbr.rel (%p636) target = $region72
        $region71: #{tpu_custom_call.1} parent=67 // pred_region
          %s639 = sand.u32 %s194, 1
          %s640 = scalar_lea.sflag [#allocation4], %s639
          %s641 = sand.u32 %s194, 1
          %s642 = smul.addr %s641, 8
          %s643 = scalar_lea.vmem [#allocation9], %s642
          %644 = dma.done %s640, 128
        $region72: #{tpu_custom_call.1} parent=67 // pred_fallthru
          _
      $region68: #{tpu_custom_call.1} parent=5 // pred_fallthru
        _
    $region6: #{tpu_custom_call.1} parent=1 // loop_footer
      %s27 = sadd.s32 1, %s23
    $region7: #{tpu_custom_call.1} parent=1 // loop_footer_branch
      %22 = sbr.rel target = $region3
    $region8: #{tpu_custom_call.1} parent=1 // loop_exit
      _
    %645 = vsyncpa [#allocation3], 1
    %s646 = scalar_lea.sflag [#allocation3], 1
    %647 = vsyncpa %s646, 1
    %648 = vsyncpa [#allocation7], 1
    %s649 = scalar_lea.sflag [#allocation7], 1
    %650 = vsyncpa %s649, 1
    %651 = vsyncpa [#allocation4], 1
    %s652 = scalar_lea.sflag [#allocation4], 1
    %653 = vsyncpa %s652, 1
    %654 = vsyncpa [#allocation5], 1
    %s655 = scalar_lea.sflag [#allocation5], 1
    %656 = vsyncpa %s655, 1

</llo_original>
